<compile_context>
chip_gen: v6e
topology: v6e:2x2x1
jax: 0.10.0
libtpu: 0.0.40
codegen_flags: <defaults>
</compile_context>

<pallas_src>
import jax
import jax.numpy as jnp
from jax import lax
from jax.experimental import pallas as pl
from jax.experimental.pallas import tpu as pltpu


def _round_up(a, b):
    return ((a + b - 1) // b) * b


def _vmem_capacity_bytes():
    try:
        return int(pltpu.get_tpu_info().vmem_capacity_bytes)
    except Exception:
        return 64 * 1024 * 1024  # conservative fallback (v7x per-core VMEM)


def pipeline_kernel(x_ref, w_ref, b_ref, out_ref):
    # out_T[o, n] = sum_d W^T[o, d] * x[n, d] + b[o]
    # (same "contract last dims of both operands" pattern as q @ k^T in flash
    #  attention; result is lane-dense with the batch dim on the 128-lane axis)
    out_ref[...] = (
        lax.dot_general(
            w_ref[...], x_ref[...],
            dimension_numbers=(((1,), (1,)), ((), ())),
            preferred_element_type=jnp.float32,
        )
        + b_ref[...]
    )


def prepare_pipeline(mean, scale, pca_mean, components_t, coef_t, intercept,
                     compute_dtype=jnp.float32):
    """Collapse scaler -> PCA -> linear into one affine map.  Call ONCE per
    fitted model and cache the result (dead per-call work otherwise).

    Returns (w_t_p, b_p, n_outputs):
      w_t_p : (O_pad, D) transposed fused weight (O padded to a multiple of 8)
      b_p   : (O_pad, 1) fused bias, f32
    """
    f32 = jnp.float32
    D = components_t.shape[0]
    O = coef_t.shape[1]
    O_pad = _round_up(O, 8)

    inv_scale = (1.0 / scale.astype(f32)).reshape(1, D)
    M = jnp.dot(components_t.astype(f32), coef_t.astype(f32),
                preferred_element_type=f32)                       # (D, O)
    W = inv_scale.reshape(D, 1) * M                               # (D, O)
    b = intercept.astype(f32) - jnp.dot(
        mean.astype(f32) * inv_scale + pca_mean.astype(f32), M,
        preferred_element_type=f32)                               # (1, O)

    w_t_p = jnp.zeros((O_pad, D), compute_dtype).at[:O, :].set(
        W.T.astype(compute_dtype))
    b_p = jnp.zeros((O_pad, 1), f32).at[:O, :].set(b.T.astype(f32))
    return w_t_p, b_p, O


def torch_pipeline_forward(x, w_t_p, b_p, n_outputs):
    """Fused pipeline forward. x: (N, D) -> (N, n_outputs) float32."""
    N, D = x.shape
    O_pad = w_t_p.shape[0]
    if x.dtype != w_t_p.dtype:
        x = x.astype(w_t_p.dtype)

    # ---- Batch handling: no x padding for large N; ragged last tile is masked.
    if N >= 128:
        x_in, n_eff = x, N
        n_floor = (N // 128) * 128          # keeps TILE_N <= N
    else:
        # Tiny batch: pad rows up to one 128-lane tile (negligible cost here).
        n_eff = 128
        x_in = jnp.zeros((128, D), x.dtype).at[:N, :].set(x)
        n_floor = 128

    # ---- Tile sizing from per-generation VMEM budget (64 MiB v7x, 128 MiB
    #      v5e/v6e).  TILE_N must be a multiple of 128 (it is the lane dim of
    #      the output block).
    capacity = _vmem_capacity_bytes()
    vmem_budget = min(int(capacity * 0.7), 100 * 1024 * 1024)
    d_lanes = _round_up(D, 128)                      # VMEM lane padding of x tile
    per_row = (2 * d_lanes * x_in.dtype.itemsize     # double-buffered x tile
               + 2 * 4 * O_pad)                      # double-buffered f32 out tile
    resident = 2 * (O_pad * d_lanes * w_t_p.dtype.itemsize + O_pad * 128 * 4)
    # TODO(synk): for very large D where W itself blows the VMEM budget, add an
    # inner "arbitrary" feature-axis with an f32 accumulator instead.
    tile_n = (int(0.8 * vmem_budget) - resident) // per_row
    tile_n = max(128, (tile_n // 128) * 128)
    tile_n = min(tile_n, 32768, n_floor)

    grid = (pl.cdiv(n_eff, tile_n),)
    cost = pl.CostEstimate(
        flops=int(2 * n_eff * D * O_pad),
        transcendentals=0,
        bytes_accessed=int(x_in.dtype.itemsize * n_eff * D
                           + w_t_p.dtype.itemsize * O_pad * D
                           + 4 * O_pad * n_eff),
    )

    out_t = pl.pallas_call(
        pipeline_kernel,
        out_shape=jax.ShapeDtypeStruct((O_pad, n_eff), jnp.float32),
        grid=grid,
        in_specs=[
            pl.BlockSpec((tile_n, D), lambda i: (i, 0)),   # x row tile (pipelined)
            pl.BlockSpec((O_pad, D), lambda i: (0, 0)),    # fused W^T (VMEM resident)
            pl.BlockSpec((O_pad, 1), lambda i: (0, 0)),    # fused bias (VMEM resident)
        ],
        out_specs=pl.BlockSpec((O_pad, tile_n), lambda i: (0, i)),
        compiler_params=pltpu.CompilerParams(
            dimension_semantics=("parallel",),   # shard batch tiles over v7x's 2 TCs
            vmem_limit_bytes=int(vmem_budget),
        ),
        cost_estimate=cost,
    )(x_in, w_t_p, b_p)

    # Tiny (O, N) -> (N, O) transpose: only O*N useful floats are touched
    # (vs. re-reading a 128-lane padded slab in the previous version).
    return out_t[:n_outputs, :N].T


def reference_forward(x, mean, scale, pca_mean, components_t, coef_t, intercept):
    # Staged reference == original module semantics (scaler -> pca -> linear).
    y = (x - mean) / scale
    y = (y - pca_mean) @ components_t
    return y @ coef_t + intercept


if __name__ == "__main__":
    N, D, K, O = 8, 32, 16, 4  # batch, features, pca components, outputs

    key = jax.random.PRNGKey(0)
    kx, k1, k2, k3, k4, k5, k6 = jax.random.split(key, 7)

    x = jax.random.normal(kx, (N, D), dtype=jnp.float32)

    # Deterministic synthetic "fitted" parameters.
    mean = jax.random.normal(k1, (1, D), dtype=jnp.float32)
    scale = jnp.abs(jax.random.normal(k2, (1, D), dtype=jnp.float32)) + 0.5
    pca_mean = jax.random.normal(k3, (1, D), dtype=jnp.float32) * 0.1
    components_t = jax.random.normal(k4, (D, K), dtype=jnp.float32) / jnp.sqrt(D)
    coef_t = jax.random.normal(k5, (K, O), dtype=jnp.float32) / jnp.sqrt(K)
    intercept = jax.random.normal(k6, (1, O), dtype=jnp.float32)

    # Fused affine params prepared once (cache these across forward calls).
    w_t_p, b_p, n_out = prepare_pipeline(mean, scale, pca_mean, components_t,
                                         coef_t, intercept)

    out = torch_pipeline_forward(x, w_t_p, b_p, n_out)
    out = jax.block_until_ready(out)

    ref = reference_forward(x, mean, scale, pca_mean, components_t, coef_t,
                            intercept)
    assert out.shape == (N, O)
    assert jnp.allclose(out, ref, atol=1e-3, rtol=1e-3)

    print("KERNEL_OK")
</pallas_src>

<mosaic_0001>
module attributes {stable_mosaic.version = 11 : i64} {
  func.func @pipeline_kernel(%arg0: i32, %arg1: memref<128x32xf32, #tpu.memory_space<vmem>>, %arg2: memref<8x32xf32, #tpu.memory_space<vmem>>, %arg3: memref<8x1xf32, #tpu.memory_space<vmem>>, %arg4: memref<8x128xf32, #tpu.memory_space<vmem>>) attributes {dimension_semantics = [#tpu.dimension_semantics<parallel>], iteration_bounds = array<i64: 1>, scalar_prefetch = 0 : i64, scratch_operands = 0 : i64, tpu.core_type = #tpu.core_type<tc>, window_params = [{transform_indices = @transform_0, window_bounds = array<i64: 128, 32>}, {pipeline_mode = #tpu.pipeline_mode<synchronous>, transform_indices = @transform_1, window_bounds = array<i64: 8, 32>}, {pipeline_mode = #tpu.pipeline_mode<synchronous>, transform_indices = @transform_2, window_bounds = array<i64: 8, 1>}, {transform_indices = @transform_3, window_bounds = array<i64: 8, 128>}]} {
    %c0 = arith.constant 0 : index
    %c0_0 = arith.constant 0 : index
    %0 = vector.load %arg2[%c0, %c0_0] : memref<8x32xf32, #tpu.memory_space<vmem>>, vector<8x32xf32>
    %c0_1 = arith.constant 0 : index
    %c0_2 = arith.constant 0 : index
    %1 = vector.load %arg1[%c0_1, %c0_2] : memref<128x32xf32, #tpu.memory_space<vmem>>, vector<128x32xf32>
    %cst = arith.constant dense<0.000000e+00> : vector<8x128xf32>
    %2 = tpu.matmul %0, %1, %cst {dimension_numbers = #tpu.dot_dimension_numbers<[1], [1], [0], [0], [0, 0, 1, 0], [], []>} : vector<8x32xf32>, vector<128x32xf32>, vector<8x128xf32> -> vector<8x128xf32>
    %c0_3 = arith.constant 0 : index
    %c0_4 = arith.constant 0 : index
    %3 = vector.load %arg3[%c0_3, %c0_4] : memref<8x1xf32, #tpu.memory_space<vmem>>, vector<8x1xf32>
    %4 = vector.broadcast %3 : vector<8x1xf32> to vector<8x128xf32>
    %5 = arith.addf %2, %4 : vector<8x128xf32>
    %c0_5 = arith.constant 0 : index
    %c0_6 = arith.constant 0 : index
    %6 = vector.load %arg4[%c0_5, %c0_6] : memref<8x128xf32, #tpu.memory_space<vmem>>, vector<8x128xf32>
    tpu.vector_store %arg4[%c0_5, %c0_6], %5 {strides = array<i32>} : memref<8x128xf32, #tpu.memory_space<vmem>>, vector<8x128xf32>,
    return
  }
  func.func @transform_0(%arg0: i32) -> (i32, i32) {
    %c0_i32 = arith.constant 0 : i32
    %c0_i32_0 = arith.constant 0 : i32
    return %arg0, %c0_i32 : i32, i32
  }
  func.func @transform_1(%arg0: i32) -> (i32, i32) {
    %c0_i32 = arith.constant 0 : i32
    %c0_i32_0 = arith.constant 0 : i32
    %c0_i32_1 = arith.constant 0 : i32
    return %c0_i32, %c0_i32_0 : i32, i32
  }
  func.func @transform_2(%arg0: i32) -> (i32, i32) {
    %c0_i32 = arith.constant 0 : i32
    %c0_i32_0 = arith.constant 0 : i32
    %c0_i32_1 = arith.constant 0 : i32
    return %c0_i32, %c0_i32_0 : i32, i32
  }
  func.func @transform_3(%arg0: i32) -> (i32, i32) {
    %c0_i32 = arith.constant 0 : i32
    %c0_i32_0 = arith.constant 0 : i32
    return %c0_i32, %arg0 : i32, i32
  }
}

</mosaic_0001>

<llo_original>
// kernel: tpu_custom_call.1
$region0: #{tpu_custom_call.1}
  #allocation0 [shape = 'u32[]', space=smem, size = 0x4, offset = 0x4, fixed_abs, tag = 'smem constant byte address 0x4 - core index']
  #allocation1 [shape = 'u32[144,128]{1,0:T(1,128)}', space=vmem, size = 0x12000, scoped, tag = 'internal scratch']
  %s0 = inlined_call_operand.vmem [shape: f32[128,32], index: 0, kind: input, shape index: {}]
  %s1 = inlined_call_operand.vmem [shape: f32[8,32], index: 1, kind: input, shape index: {}]
  %s2 = inlined_call_operand.vmem [shape: f32[8,1], index: 2, kind: input, shape index: {}]
  %s3 = inlined_call_operand.hbm [shape: f32[8,128], index: 3, kind: output, shape index: {}]
  %s4 = sld [smem:[#allocation0]]
  $region22: #{tpu_custom_call.1} parent=0
    _
  %s6 = ssub.s32 1, %s4
  %s7 = scalar_select 0, %s6, %s4
  $region1: #{tpu_custom_call.1} parent=0
    #allocation2 [shape = 'u8[4096]{0}', space=vmem, size = 0x1000, scoped, tag = 'output window, operand 0, single buffered']
    #allocation3 [shape = 's32[1]{0}', space=sflag, size = 0x4, scoped, tag = 'scoped memory for tpu_custom_call.1']
    %8 = vsyncpa [#allocation3], 0
    // Predicated region
    $region2: #{tpu_custom_call.1} parent=1 // pred_check
      _
    $region3: #{tpu_custom_call.1} parent=1 // pred_check_branch
      %10 = sbr.rel (0) target = $region5
    $region4: #{tpu_custom_call.1} parent=1 // pred_region
      _
    $region5: #{tpu_custom_call.1} parent=1 // pred_fallthru
      _
    // Predicated region
    $region6: #{tpu_custom_call.1} parent=1 // pred_check
      _
    $region7: #{tpu_custom_call.1} parent=1 // pred_check_branch
      %12 = sbr.rel (0) target = $region9
    $region8: #{tpu_custom_call.1} parent=1 // pred_region
      _
    $region9: #{tpu_custom_call.1} parent=1 // pred_fallthru
      _
    // Predicated region
    $region10: #{tpu_custom_call.1} parent=1 // pred_check
      _
    $region11: #{tpu_custom_call.1} parent=1 // pred_check_branch
      %14 = sbr.rel (0) target = $region13
    $region12: #{tpu_custom_call.1} parent=1 // pred_region
      _
    $region13: #{tpu_custom_call.1} parent=1 // pred_fallthru
      _
    %v15 = vld [vmem:[%s1] sm:$0xff]
    %v16 = vld [vmem:[%s0] sm:$0xff]
    %v17 = vld [vmem:[%s0 + $0x8] sm:$0xff]
    %v18 = vld [vmem:[%s0 + $0x10] sm:$0xff]
    %v19 = vld [vmem:[%s0 + $0x18] sm:$0xff]
    %v20 = vld [vmem:[%s0 + $0x20] sm:$0xff]
    %v21 = vld [vmem:[%s0 + $0x28] sm:$0xff]
    %v22 = vld [vmem:[%s0 + $0x30] sm:$0xff]
    %v23 = vld [vmem:[%s0 + $0x38] sm:$0xff]
    %v24 = vld [vmem:[%s0 + $0x40] sm:$0xff]
    %v25 = vld [vmem:[%s0 + $0x48] sm:$0xff]
    %v26 = vld [vmem:[%s0 + $0x50] sm:$0xff]
    %v27 = vld [vmem:[%s0 + $0x58] sm:$0xff]
    %v28 = vld [vmem:[%s0 + $0x60] sm:$0xff]
    %v29 = vld [vmem:[%s0 + $0x68] sm:$0xff]
    %v30 = vld [vmem:[%s0 + $0x70] sm:$0xff]
    %v31 = vld [vmem:[%s0 + $0x78] sm:$0xff]
    %v32 = vld [vmem:[%s2] sm:$0xff]
    %34 = vset.pattern.permute.xlu0 0
    %35 = vperm.xlu0 %34, %v32
    %v36 = vpop.permute.xlu0 %35
    %vm38 = vcmask 261120
    %v40 = vsel %vm38, %v15, 0
    %v43 = vsel %vm38, %v16, 0
    %v46 = vsel %vm38, %v17, 0
    %v49 = vsel %vm38, %v18, 0
    %v52 = vsel %vm38, %v19, 0
    %v55 = vsel %vm38, %v20, 0
    %v58 = vsel %vm38, %v21, 0
    %v61 = vsel %vm38, %v22, 0
    %v64 = vsel %vm38, %v23, 0
    %v67 = vsel %vm38, %v24, 0
    %v70 = vsel %vm38, %v25, 0
    %v73 = vsel %vm38, %v26, 0
    %v76 = vsel %vm38, %v27, 0
    %v79 = vsel %vm38, %v28, 0
    %v82 = vsel %vm38, %v29, 0
    %v85 = vsel %vm38, %v30, 0
    %v88 = vsel %vm38, %v31, 0
    %90 = vmatprep.subr.mxu0 0.0
    %91 = vmatpush1.xpose.msra.mxu0 %v88
    %92 = vmatprep.subr.mxu0 0.0
    %93 = vmatpush1.xpose.msra.mxu0 %v85
    %94 = vmatprep.subr.mxu0 0.0
    %95 = vmatpush1.xpose.msra.mxu0 %v82
    %96 = vmatprep.subr.mxu0 0.0
    %97 = vmatpush1.xpose.msra.mxu0 %v79
    %98 = vmatprep.subr.mxu0 0.0
    %99 = vmatpush1.xpose.msra.mxu0 %v76
    %100 = vmatprep.subr.mxu0 0.0
    %101 = vmatpush1.xpose.msra.mxu0 %v73
    %102 = vmatprep.subr.mxu0 0.0
    %103 = vmatpush1.xpose.msra.mxu0 %v70
    %104 = vmatprep.subr.mxu0 0.0
    %105 = vmatpush1.xpose.msra.mxu0 %v67
    %106 = vmatprep.subr.mxu0 0.0
    %107 = vmatpush1.xpose.msra.mxu0 %v64
    %108 = vmatprep.subr.mxu0 0.0
    %109 = vmatpush1.xpose.msra.mxu0 %v61
    %110 = vmatprep.subr.mxu0 0.0
    %111 = vmatpush1.xpose.msra.mxu0 %v58
    %112 = vmatprep.subr.mxu0 0.0
    %113 = vmatpush1.xpose.msra.mxu0 %v55
    %114 = vmatprep.subr.mxu0 0.0
    %115 = vmatpush1.xpose.msra.mxu0 %v52
    %116 = vmatprep.subr.mxu0 0.0
    %117 = vmatpush1.xpose.msra.mxu0 %v49
    %118 = vmatprep.subr.mxu0 0.0
    %119 = vmatpush1.xpose.msra.mxu0 %v46
    %120 = vmatprep.subr.mxu0 0.0
    %121 = vmatpush1.xpose.msra.mxu0 %v43
    %122 = vmatprep.subr.mxu0 0.0
    %123 = vmatpush2.xpose.msra.mxu0 0.0
    %124 = vmatprep.subr.mxu0 0.0
    %125 = vmatpush2.xpose.msra.mxu0 0.0
    %126 = vmatprep.subr.mxu0 0.0
    %127 = vmatpush2.xpose.msra.mxu0 0.0
    %128 = vmatprep.subr.mxu0 0.0
    %129 = vmatpush2.xpose.msra.mxu0 0.0
    %130 = vmatprep.subr.mxu0 0.0
    %131 = vmatpush2.xpose.msra.mxu0 0.0
    %132 = vmatprep.subr.mxu0 0.0
    %133 = vmatpush2.xpose.msra.mxu0 0.0
    %134 = vmatprep.subr.mxu0 0.0
    %135 = vmatpush2.xpose.msra.mxu0 0.0
    %136 = vmatprep.subr.mxu0 0.0
    %137 = vmatpush2.xpose.msra.mxu0 0.0
    %138 = vmatprep.subr.mxu0 0.0
    %139 = vmatpush2.xpose.msra.mxu0 0.0
    %140 = vmatprep.subr.mxu0 0.0
    %141 = vmatpush2.xpose.msra.mxu0 0.0
    %142 = vmatprep.subr.mxu0 0.0
    %143 = vmatpush2.xpose.msra.mxu0 0.0
    %144 = vmatprep.subr.mxu0 0.0
    %145 = vmatpush2.xpose.msra.mxu0 0.0
    %146 = vmatprep.subr.mxu0 0.0
    %147 = vmatpush2.xpose.msra.mxu0 0.0
    %148 = vmatprep.subr.mxu0 0.0
    %149 = vmatpush2.xpose.msra.mxu0 0.0
    %150 = vmatprep.subr.mxu0 0.0
    %151 = vmatpush2.xpose.msra.mxu0 0.0
    %152 = vmatprep.subr.mxu0 0.0
    %153 = vmatpush2.xpose.msra.mxu0 0.0
    %154 = vmatprep.mubr.f32.mxu0 0.0
    %155 = vmatmul.mubr.f32.gmra.mxu0 %v40
    %v156 = vpop.f32.mrf.mxu0
    %v157 = vadd.f32 %v36, %v156
    %v158 = vpop.f32.mrf.mxu0
    %159 = vdwg.mxu0
    %160 = vst [vmem:[#allocation2] sm:$0xff] %v157
    // Predicated region
    $region14: #{tpu_custom_call.1} parent=1 // pred_check
      _
    $region15: #{tpu_custom_call.1} parent=1 // pred_check_branch
      %162 = sbr.rel (0) target = $region17
    $region16: #{tpu_custom_call.1} parent=1 // pred_region
      %s164 = ssub.s32 128, 128
      %165 = vsyncadd [#allocation3], %s164
      %s167 = sshll.u32 [#allocation2], 4
      %s168 = int_to_ptr.vmem [resolvable:$true] %s167
      %170 = dma.vmem_to_hbm [thread:$0]  %s168, 128, %s3, [#allocation3]
    $region17: #{tpu_custom_call.1} parent=1 // pred_fallthru
      _
    // Predicated region
    $region18: #{tpu_custom_call.1} parent=1 // pred_check
      _
    $region19: #{tpu_custom_call.1} parent=1 // pred_check_branch
      %172 = sbr.rel (0) target = $region21
    $region20: #{tpu_custom_call.1} parent=1 // pred_region
      %173 = dma.done [#allocation3], 128
    $region21: #{tpu_custom_call.1} parent=1 // pred_fallthru
      _
    %174 = vsyncpa [#allocation3], 1

</llo_original>
